<compile_context>
chip_gen: v7x
topology: tpu7x:2x2x1
jax: 0.10.0
libtpu: 0.0.40
codegen_flags: <defaults>
</compile_context>

<pallas_src>
import jax
import jax.numpy as jnp
from jax.experimental import pallas as pl
from jax.experimental.pallas import tpu as pltpu


def _round_up(x, m):
    return ((x + m - 1) // m) * m


def _vmem_capacity_bytes():
    try:
        return int(pltpu.get_tpu_info().vmem_capacity_bytes)
    except Exception:
        return 64 << 20  # conservative: v7x per-TensorCore VMEM


def _gated_fusion_kernel(x1_ref, x2_ref, w_ref, b_ref, out_ref):
    cdt = w_ref.dtype                                   # MXU compute dtype
    x1 = x1_ref[...]                                    # [bm, Dp]
    x2 = x2_ref[...]                                    # [bm, Dp]
    # Fused matmul: [x1 | x2] @ [[W1],[W2]]  -> one MXU pass with K = 2*Dp.
    xc = jnp.concatenate([x1.astype(cdt), x2.astype(cdt)], axis=-1)
    acc = jnp.dot(xc, w_ref[...], preferred_element_type=jnp.float32)
    z = jax.nn.sigmoid(acc + b_ref[...])                # bias = b1 + b2 (folded); EUP
    x1f = x1.astype(jnp.float32)
    x2f = x2.astype(jnp.float32)
    # z*x1 + (1-z)*x2 + x1 + x2  ==  (1+z)*x1 + (2-z)*x2
    out_ref[...] = ((1.0 + z) * x1f + (2.0 - z) * x2f).astype(out_ref.dtype)


def gated_fusion(x1, x2, params, *, block_b=512, compute_dtype=jnp.bfloat16,
                 out_dtype=None, vmem_limit_bytes=None):
    """Fused forward of the PyTorch gatedFusion module. x1, x2: [B, dim].

    params["w1"], params["w2"] are stored [in, out] (i.e. already transposed
    relative to torch's nn.Linear.weight), params["b1"], params["b2"]: [dim].
    """
    w1, b1, w2, b2 = params["w1"], params["b1"], params["w2"], params["b2"]
    B, dim = x1.shape
    assert x2.shape == (B, dim)
    assert w1.shape == (dim, dim) and w2.shape == (dim, dim)
    out_dtype = x1.dtype if out_dtype is None else out_dtype

    # ---- tiling --------------------------------------------------------
    dim_p = _round_up(dim, 128)                      # lane-dense feature axis
    b8 = _round_up(B, 8)
    block = max(8, min(_round_up(block_b, 8), b8))   # batch tile (tunable)
    if b8 >= 16:
        # at least 2 grid steps: feeds both v7x TensorCores and overlaps DMA.
        block = max(8, min(block, _round_up(pl.cdiv(b8, 2), 8)))

    # ---- (minimal) padding ---------------------------------------------
    pad_f = dim_p - dim                              # only if dim % 128 != 0
    pad_b = (b8 - B) if block > B else 0             # only if B < one 8-row tile
    if pad_f or pad_b:
        # Only rewrite activations when unavoidable; an unaligned batch with
        # B >= block is carried by a partial last grid step instead.
        x1 = jnp.pad(x1, ((0, pad_b), (0, pad_f)))
        x2 = jnp.pad(x2, ((0, pad_b), (0, pad_f)))
    B_arr = B + pad_b

    # Stacked weight W = [[W1], [W2]] (2*dim_p, dim_p): one resident buffer,
    # single MXU pass per tile.  Bias folded to one row (b1 + b2).
    def padw(w):
        return jnp.pad(w, ((0, pad_f), (0, pad_f)))
    w_st = jnp.concatenate([padw(w1), padw(w2)], axis=0).astype(compute_dtype)
    b_row = jnp.pad((b1 + b2).astype(jnp.float32), (0, pad_f)).reshape(1, dim_p)

    grid = (pl.cdiv(B_arr, block),)

    # ---- explicit, generation-aware VMEM budget --------------------------
    if vmem_limit_bytes is None:
        xb = jnp.dtype(x1.dtype).itemsize
        ob = jnp.dtype(out_dtype).itemsize
        wb = jnp.dtype(compute_dtype).itemsize
        need = (2 * 2 * block * dim_p * xb        # x1, x2: 2-deep pipeline
                + 2 * block * dim_p * ob          # out:    2-deep pipeline
                + 2 * 2 * dim_p * dim_p * wb      # stacked W (const index, 2 bufs alloc'd)
                + 2 * 8 * dim_p * 4               # bias row (sublane padded)
                + block * 2 * dim_p * wb          # in-kernel concat temp
                + 3 * block * dim_p * 4)          # f32 acc / z / temps
        cap = _vmem_capacity_bytes()
        # ~81% of physical VMEM: ≈104 MiB on 128 MiB parts, ≈52 MiB on v7x.
        vmem_limit_bytes = min(max(need + (4 << 20), 32 << 20), cap * 13 // 16)

    def const_spec(shape):
        # Constant index_map: fetched once on the first grid step, then reused.
        return pl.BlockSpec(shape, lambda i: (0,) * len(shape))

    x_spec = pl.BlockSpec((block, dim_p), lambda i: (i, 0))
    out_spec = pl.BlockSpec((block, dim_p), lambda i: (i, 0))

    out_p = pl.pallas_call(
        _gated_fusion_kernel,
        out_shape=jax.ShapeDtypeStruct((B_arr, dim_p), out_dtype),
        grid=grid,
        in_specs=[x_spec, x_spec,
                  const_spec((2 * dim_p, dim_p)),   # stacked W1/W2 (resident)
                  const_spec((1, dim_p))],          # folded bias b1 + b2
        out_specs=out_spec,
        compiler_params=pltpu.CompilerParams(
            dimension_semantics=("parallel",),
            vmem_limit_bytes=int(vmem_limit_bytes)),
    )(x1, x2, w_st, b_row)

    if pad_f or pad_b:
        return out_p[:B, :dim]
    return out_p


def _reference(x1, x2, params):
    """Pure-JAX re-implementation of the PyTorch forward."""
    x11 = x1 @ params["w1"] + params["b1"]
    x22 = x2 @ params["w2"] + params["b2"]
    z = jax.nn.sigmoid(x11 + x22)
    return z * x1 + (1.0 - z) * x2 + x1 + x2


if __name__ == "__main__":
    def make_params(key, dim):
        kw1, kb1, kw2, kb2 = jax.random.split(key, 4)
        s = 1.0 / float(dim) ** 0.5
        return {
            "w1": jax.random.uniform(kw1, (dim, dim), jnp.float32, -s, s),
            "b1": jax.random.uniform(kb1, (dim,), jnp.float32, -s, s),
            "w2": jax.random.uniform(kw2, (dim, dim), jnp.float32, -s, s),
            "b2": jax.random.uniform(kb2, (dim,), jnp.float32, -s, s),
        }

    key = jax.random.PRNGKey(0)
    k1, k2, kp, k3, k4, kp2 = jax.random.split(key, 6)

    # Aligned case: activations passed with zero wrapper-side padding/casting;
    # block clamps to 32 rows -> 2 "parallel" grid steps (both v7x TCs busy).
    B, DIM = 64, 128
    x1 = jax.random.normal(k1, (B, DIM), jnp.float32)
    x2 = jax.random.normal(k2, (B, DIM), jnp.float32)
    params = make_params(kp, DIM)
    ref = _reference(x1, x2, params)

    # f32 MXU path: tight check vs the pure-JAX reference.
    out_f32 = jax.block_until_ready(
        gated_fusion(x1, x2, params, compute_dtype=jnp.float32))
    assert out_f32.shape == (B, DIM)
    assert jnp.allclose(out_f32, ref, atol=1e-5, rtol=1e-5), "f32 mismatch vs reference"

    # Default path: bf16 weights / f32 accumulation, f32 gating & residual.
    out_bf16 = jax.block_until_ready(gated_fusion(x1, x2, params))
    assert out_bf16.shape == (B, DIM)
    assert jnp.allclose(out_bf16, ref, atol=5e-2, rtol=5e-2), "bf16 mismatch vs reference"

    # Unaligned shapes: feature axis padded 96 -> 128 lanes; batch 10 handled
    # by a partial last grid step (block 8, grid 2) with no batch re-pad.
    B2, DIM2 = 10, 96
    x1b = jax.random.normal(k3, (B2, DIM2), jnp.float32)
    x2b = jax.random.normal(k4, (B2, DIM2), jnp.float32)
    params2 = make_params(kp2, DIM2)
    out2 = jax.block_until_ready(
        gated_fusion(x1b, x2b, params2, compute_dtype=jnp.float32))
    ref2 = _reference(x1b, x2b, params2)
    assert out2.shape == (B2, DIM2)
    assert jnp.allclose(out2, ref2, atol=1e-5, rtol=1e-5), "padded-case mismatch"

    print("KERNEL_OK")
</pallas_src>

<mosaic_0001>
module attributes {stable_mosaic.version = 11 : i64} {
  func.func @_gated_fusion_kernel(%arg0: i32, %arg1: memref<32x128xf32, #tpu.memory_space<vmem>>, %arg2: memref<32x128xf32, #tpu.memory_space<vmem>>, %arg3: memref<256x128xf32, #tpu.memory_space<vmem>>, %arg4: memref<1x128xf32, #tpu.memory_space<vmem>>, %arg5: memref<32x128xf32, #tpu.memory_space<vmem>>) attributes {dimension_semantics = [#tpu.dimension_semantics<parallel>], iteration_bounds = array<i64: 2>, scalar_prefetch = 0 : i64, scratch_operands = 0 : i64, tpu.core_type = #tpu.core_type<tc>, window_params = [{transform_indices = @transform_0, window_bounds = array<i64: 32, 128>}, {transform_indices = @transform_1, window_bounds = array<i64: 32, 128>}, {pipeline_mode = #tpu.pipeline_mode<synchronous>, transform_indices = @transform_2, window_bounds = array<i64: 256, 128>}, {pipeline_mode = #tpu.pipeline_mode<synchronous>, transform_indices = @transform_3, window_bounds = array<i64: 1, 128>}, {transform_indices = @transform_4, window_bounds = array<i64: 32, 128>}]} {
    %c0 = arith.constant 0 : index
    %c0_0 = arith.constant 0 : index
    %0 = vector.load %arg1[%c0, %c0_0] : memref<32x128xf32, #tpu.memory_space<vmem>>, vector<32x128xf32>
    %c0_1 = arith.constant 0 : index
    %c0_2 = arith.constant 0 : index
    %1 = vector.load %arg2[%c0_1, %c0_2] : memref<32x128xf32, #tpu.memory_space<vmem>>, vector<32x128xf32>
    %2 = tpu.concatenate %0, %1 in 1 : vector<32x128xf32>, vector<32x128xf32> -> vector<32x256xf32>
    %c0_3 = arith.constant 0 : index
    %c0_4 = arith.constant 0 : index
    %3 = vector.load %arg3[%c0_3, %c0_4] : memref<256x128xf32, #tpu.memory_space<vmem>>, vector<256x128xf32>
    %cst = arith.constant dense<0.000000e+00> : vector<32x128xf32>
    %4 = tpu.matmul %2, %3, %cst {dimension_numbers = #tpu.dot_dimension_numbers<[1], [0], [0], [1], [0, 0, 1, 1], [], []>} : vector<32x256xf32>, vector<256x128xf32>, vector<32x128xf32> -> vector<32x128xf32>
    %c0_5 = arith.constant 0 : index
    %c0_6 = arith.constant 0 : index
    %5 = vector.load %arg4[%c0_5, %c0_6] : memref<1x128xf32, #tpu.memory_space<vmem>>, vector<1x128xf32>
    %6 = vector.broadcast %5 : vector<1x128xf32> to vector<32x128xf32>
    %7 = arith.addf %4, %6 : vector<32x128xf32>
    %8 = arith.negf %7 : vector<32x128xf32>
    %9 = math.exp %8 : vector<32x128xf32>
    %cst_7 = arith.constant 1.000000e+00 : f32
    %10 = vector.broadcast %cst_7 : f32 to vector<32x128xf32>
    %11 = arith.addf %10, %9 : vector<32x128xf32>
    %12 = arith.divf %10, %11 : vector<32x128xf32>
    %cst_8 = arith.constant 1.000000e+00 : f32
    %13 = vector.broadcast %cst_8 : f32 to vector<32x128xf32>
    %14 = arith.addf %13, %12 : vector<32x128xf32>
    %15 = arith.mulf %14, %0 : vector<32x128xf32>
    %cst_9 = arith.constant 2.000000e+00 : f32
    %16 = vector.broadcast %cst_9 : f32 to vector<32x128xf32>
    %17 = arith.subf %16, %12 : vector<32x128xf32>
    %18 = arith.mulf %17, %1 : vector<32x128xf32>
    %19 = arith.addf %15, %18 : vector<32x128xf32>
    %c0_10 = arith.constant 0 : index
    %c0_11 = arith.constant 0 : index
    %20 = vector.load %arg5[%c0_10, %c0_11] : memref<32x128xf32, #tpu.memory_space<vmem>>, vector<32x128xf32>
    tpu.vector_store %arg5[%c0_10, %c0_11], %19 {strides = array<i32>} : memref<32x128xf32, #tpu.memory_space<vmem>>, vector<32x128xf32>,
    return
  }
  func.func @transform_0(%arg0: i32) -> (i32, i32) {
    %c0_i32 = arith.constant 0 : i32
    %c0_i32_0 = arith.constant 0 : i32
    return %arg0, %c0_i32 : i32, i32
  }
  func.func @transform_1(%arg0: i32) -> (i32, i32) {
    %c0_i32 = arith.constant 0 : i32
    %c0_i32_0 = arith.constant 0 : i32
    return %arg0, %c0_i32 : i32, i32
  }
  func.func @transform_2(%arg0: i32) -> (i32, i32) {
    %c0_i32 = arith.constant 0 : i32
    %c0_i32_0 = arith.constant 0 : i32
    %c0_i32_1 = arith.constant 0 : i32
    return %c0_i32, %c0_i32_0 : i32, i32
  }
  func.func @transform_3(%arg0: i32) -> (i32, i32) {
    %c0_i32 = arith.constant 0 : i32
    %c0_i32_0 = arith.constant 0 : i32
    %c0_i32_1 = arith.constant 0 : i32
    return %c0_i32, %c0_i32_0 : i32, i32
  }
  func.func @transform_4(%arg0: i32) -> (i32, i32) {
    %c0_i32 = arith.constant 0 : i32
    %c0_i32_0 = arith.constant 0 : i32
    return %arg0, %c0_i32 : i32, i32
  }
}

</mosaic_0001>

<llo_original>
// kernel: tpu_custom_call.1
$region0: #{tpu_custom_call.1}
  #allocation0 [shape = 'u32[]', space=smem, size = 0x4, offset = 0x4, fixed_abs, tag = 'smem constant byte address 0x4 - core index']
  #allocation1 [shape = 'u32[144,128]{1,0:T(1,128)}', space=vmem, size = 0x12000, scoped, tag = 'internal scratch']
  %s0 = inlined_call_operand.hbm [shape: f32[64,128], index: 0, kind: input, shape index: {}]
  %s1 = inlined_call_operand.hbm [shape: f32[64,128], index: 1, kind: input, shape index: {}]
  %s2 = inlined_call_operand.hbm [shape: f32[256,128], index: 2, kind: input, shape index: {}]
  %s3 = inlined_call_operand.vmem [shape: f32[1,128], index: 3, kind: input, shape index: {}]
  %s4 = inlined_call_operand.hbm [shape: f32[64,128], index: 4, kind: output, shape index: {}]
  %s5 = sld [smem:[#allocation0]]
  $region61: #{tpu_custom_call.1} parent=0
    _
  %s7 = ssub.s32 1, %s5
  %s8 = scalar_select 0, %s7, %s5
  $region1: #{tpu_custom_call.1} parent=0
    #allocation2 [shape = 'u8[32768]{0}', space=vmem, size = 0x8000, scoped, tag = 'input window, operand 0']
    #allocation3 [shape = 's32[2]{0}', space=sflag, size = 0x8, scoped, tag = 'scoped memory for tpu_custom_call.1']
    #allocation4 [shape = 's32[2]{0}', space=sflag, size = 0x8, scoped, tag = 'scoped memory for tpu_custom_call.1']
    #allocation5 [shape = 'u8[32768]{0}', space=vmem, size = 0x8000, scoped, tag = 'input window, operand 1']
    #allocation6 [shape = 's32[2]{0}', space=sflag, size = 0x8, scoped, tag = 'scoped memory for tpu_custom_call.1']
    #allocation7 [shape = 'u8[131072]{0}', space=vmem, size = 0x20000, scoped, tag = 'input window, operand 2, single buffered']
    #allocation8 [shape = 'u8[32768]{0}', space=vmem, size = 0x8000, scoped, tag = 'output window, operand 0']
    %9 = vsyncpa [#allocation3], 0
    %s10 = scalar_lea.sflag [#allocation3], 1
    %11 = vsyncpa %s10, 0
    %12 = vsyncpa [#allocation6], 0
    %s13 = scalar_lea.sflag [#allocation6], 1
    %14 = vsyncpa %s13, 0
    %15 = vsyncpa [#allocation4], 0
    %s16 = scalar_lea.sflag [#allocation4], 1
    %17 = vsyncpa %s16, 0
    loop: start=0, step=1, limit=4
    $region2: #{tpu_custom_call.1} parent=1 // loop_pre_header
      _
    $region3: #{tpu_custom_call.1} parent=1 // loop_header
      %s19 = sphi 0, %s23
      %p20 = scmp.ge.s32.totalorder %s19, 4
      %s29 = sphi 0, %s31
      %s32 = sphi 0, %s29
      %s33 = sphi 0, %s32
      %s49 = sphi 0, %s33
      %s55 = sphi 0, %s57
      %s58 = sphi 0, %s55
      %s59 = sphi 0, %s58
      %s75 = sphi 0, %s59
      %s79 = sphi 0, %s79
      %s81 = sphi 0, %s79
      %s82 = sphi 0, %s81
      %s96 = sphi 0, %s82
      %s100 = sphi 0, %s100
      %s102 = sphi 0, %s100
      %s103 = sphi 0, %s102
      %s117 = sphi 0, %s103
      %s123 = sphi 0, %s125
      %s126 = sphi 0, %s123
      %s127 = sphi 0, %s126
      %s143 = sphi 0, %s127
    $region4: #{tpu_custom_call.1} parent=1 // loop_header_branch
      %22 = sbr.rel (%p20) target = $region8
    $region5: #{tpu_custom_call.1} parent=1 // loop_body
      %s24 = ssub.s32 %s19, 1
      %s25 = ssub.s32 %s19, 2
      %s26 = sadd.s32 %s19, 1
      %s27 = ssub.s32 %s19, %s26
      %p28 = scmp.eq.s32.totalorder %s27, 0
      %s30 = sadd.s32 %s29, 1
      %s31 = scalar_select %p28, %s29, %s30
      %p34 = pneg %p28
      %p35 = scmp.eq.s32.totalorder %s19, 1
      %p36 = por %p34, %p35
      %p37 = scmp.ne.s32.totalorder %s29, %s32
      %p38 = scmp.eq.s32.totalorder %s19, 0
      %p39 = por %p37, %p38
      %p40 = scmp.ne.s32.totalorder %s29, %s32
      %p41 = scmp.eq.s32.totalorder %s24, 1
      %p42 = por %p40, %p41
      %p43 = scmp.ne.s32.totalorder %s32, %s33
      %p44 = scmp.eq.s32.totalorder %s24, 0
      %p45 = por %p43, %p44
      %p46 = scmp.ne.s32.totalorder %s32, %s33
      %p47 = scmp.eq.s32.totalorder %s25, 1
      %p48 = por %p46, %p47
      %p50 = scmp.ne.s32.totalorder %s33, %s49
      %p51 = scmp.eq.s32.totalorder %s25, 0
      %p52 = por %p50, %p51
      %s53 = ssub.s32 %s19, %s26
      %p54 = scmp.eq.s32.totalorder %s53, 0
      %s56 = sadd.s32 %s55, 1
      %s57 = scalar_select %p54, %s55, %s56
      %p60 = pneg %p54
      %p61 = scmp.eq.s32.totalorder %s19, 1
      %p62 = por %p60, %p61
      %p63 = scmp.ne.s32.totalorder %s55, %s58
      %p64 = scmp.eq.s32.totalorder %s19, 0
      %p65 = por %p63, %p64
      %p66 = scmp.ne.s32.totalorder %s55, %s58
      %p67 = scmp.eq.s32.totalorder %s24, 1
      %p68 = por %p66, %p67
      %p69 = scmp.ne.s32.totalorder %s58, %s59
      %p70 = scmp.eq.s32.totalorder %s24, 0
      %p71 = por %p69, %p70
      %p72 = scmp.ne.s32.totalorder %s58, %s59
      %p73 = scmp.eq.s32.totalorder %s25, 1
      %p74 = por %p72, %p73
      %p76 = scmp.ne.s32.totalorder %s59, %s75
      %p77 = scmp.eq.s32.totalorder %s25, 0
      %p78 = por %p76, %p77
      %s80 = sadd.s32 %s79, 1
      %p83 = scmp.eq.s32.totalorder %s19, 1
      %p84 = scmp.ne.s32.totalorder %s79, %s81
      %p85 = scmp.eq.s32.totalorder %s19, 0
      %p86 = por %p84, %p85
      %p87 = scmp.ne.s32.totalorder %s79, %s81
      %p88 = scmp.eq.s32.totalorder %s24, 1
      %p89 = por %p87, %p88
      %p90 = scmp.ne.s32.totalorder %s81, %s82
      %p91 = scmp.eq.s32.totalorder %s24, 0
      %p92 = por %p90, %p91
      %p93 = scmp.ne.s32.totalorder %s81, %s82
      %p94 = scmp.eq.s32.totalorder %s25, 1
      %p95 = por %p93, %p94
      %p97 = scmp.ne.s32.totalorder %s82, %s96
      %p98 = scmp.eq.s32.totalorder %s25, 0
      %p99 = por %p97, %p98
      %s101 = sadd.s32 %s100, 1
      %p104 = scmp.eq.s32.totalorder %s19, 1
      %p105 = scmp.ne.s32.totalorder %s100, %s102
      %p106 = scmp.eq.s32.totalorder %s19, 0
      %p107 = por %p105, %p106
      %p108 = scmp.ne.s32.totalorder %s100, %s102
      %p109 = scmp.eq.s32.totalorder %s24, 1
      %p110 = por %p108, %p109
      %p111 = scmp.ne.s32.totalorder %s102, %s103
      %p112 = scmp.eq.s32.totalorder %s24, 0
      %p113 = por %p111, %p112
      %p114 = scmp.ne.s32.totalorder %s102, %s103
      %p115 = scmp.eq.s32.totalorder %s25, 1
      %p116 = por %p114, %p115
      %p118 = scmp.ne.s32.totalorder %s103, %s117
      %p119 = scmp.eq.s32.totalorder %s25, 0
      %p120 = por %p118, %p119
      %s121 = ssub.s32 %s19, %s26
      %p122 = scmp.eq.s32.totalorder %s121, 0
      %s124 = sadd.s32 %s123, 1
      %s125 = scalar_select %p122, %s123, %s124
      %p128 = pneg %p122
      %p129 = scmp.eq.s32.totalorder %s19, 1
      %p130 = por %p128, %p129
      %p131 = scmp.ne.s32.totalorder %s123, %s126
      %p132 = scmp.eq.s32.totalorder %s19, 0
      %p133 = por %p131, %p132
      %p134 = scmp.ne.s32.totalorder %s123, %s126
      %p135 = scmp.eq.s32.totalorder %s24, 1
      %p136 = por %p134, %p135
      %p137 = scmp.ne.s32.totalorder %s126, %s127
      %p138 = scmp.eq.s32.totalorder %s24, 0
      %p139 = por %p137, %p138
      %p140 = scmp.ne.s32.totalorder %s126, %s127
      %p141 = scmp.eq.s32.totalorder %s25, 1
      %p142 = por %p140, %p141
      %p144 = scmp.ne.s32.totalorder %s127, %s143
      %p145 = scmp.eq.s32.totalorder %s25, 0
      %p146 = por %p144, %p145
      %p147 = scmp.le.s32.totalorder 1, %s19
      %p148 = scmp.lt.s32.totalorder %s19, 3
      %p149 = pnand %p147, %p148
      %p150 = pneg %p149
      // Predicated region
      $region9: #{tpu_custom_call.1} parent=5 // pred_check
        _
      $region10: #{tpu_custom_call.1} parent=5 // pred_check_branch
        %152 = sbr.rel (%p149) target = $region12
      $region11: #{tpu_custom_call.1} parent=5 // pred_region
        %s153 = ssub.s32 %s19, 1
        // Predicated region
        $region13: #{tpu_custom_call.1} parent=11 // pred_check
          %p154 = pneg %p92
        $region14: #{tpu_custom_call.1} parent=11 // pred_check_branch
          %156 = sbr.rel (%p154) target = $region16
        $region15: #{tpu_custom_call.1} parent=11 // pred_region
          %s158 = ssub.s32 4096, 4096
          %159 = vsyncadd [#allocation6], %s158
          %s160 = sshll.u32 [#allocation7], 4
          %s161 = int_to_ptr.vmem [resolvable:$true] %s160
          %166 = dma.hbm_to_vmem [thread:$0]  %s2, 4096, %s161, [#allocation6], 128, 128, 8
        $region16: #{tpu_custom_call.1} parent=11 // pred_fallthru
          _
        // Predicated region
        $region17: #{tpu_custom_call.1} parent=11 // pred_check
          %p167 = pneg %p113
        $region18: #{tpu_custom_call.1} parent=11 // pred_check_branch
          %169 = sbr.rel (%p167) target = $region20
        $region19: #{tpu_custom_call.1} parent=11 // pred_region
          _
        $region20: #{tpu_custom_call.1} parent=11 // pred_fallthru
          _
      $region12: #{tpu_custom_call.1} parent=5 // pred_fallthru
        _
      %p170 = scmp.lt.s32.totalorder %s19, 2
      // Predicated region
      $region21: #{tpu_custom_call.1} parent=5 // pred_check
        %p171 = pneg %p170
      $region22: #{tpu_custom_call.1} parent=5 // pred_check_branch
        %173 = sbr.rel (%p171) target = $region24
      $region23: #{tpu_custom_call.1} parent=5 // pred_region
        // Predicated region
        $region25: #{tpu_custom_call.1} parent=23 // pred_check
          %p174 = pneg %p39
        $region26: #{tpu_custom_call.1} parent=23 // pred_check_branch
          %176 = sbr.rel (%p174) target = $region28
        $region27: #{tpu_custom_call.1} parent=23 // pred_region
          %s177 = sand.u32 %s29, 1
          %s178 = scalar_lea.sflag [#allocation3], %s177
          %s179 = sand.u32 %s29, 1
          %s180 = smul.addr %s179, 32
          %s181 = scalar_lea.vmem [#allocation2], %s180
          %s182 = smul.u32 4, %s19
          %s184 = ssub.s32 512, 512
          %185 = vsyncadd %s178, %s184
          %s186 = smul.addr %s182, 128
          %s187 = scalar_lea.hbm %s0, %s186
          %s188 = sshll.u32 %s181, 4
          %s189 = int_to_ptr.vmem [resolvable:$true] %s188
          %194 = dma.hbm_to_vmem [thread:$0]  %s187, 512, %s189, %s178, 128, 128, 8
        $region28: #{tpu_custom_call.1} parent=23 // pred_fallthru
          _
        // Predicated region
        $region29: #{tpu_custom_call.1} parent=23 // pred_check
          %p195 = pneg %p65
        $region30: #{tpu_custom_call.1} parent=23 // pred_check_branch
          %197 = sbr.rel (%p195) target = $region32
        $region31: #{tpu_custom_call.1} parent=23 // pred_region
          %s198 = sand.u32 %s19, 1
          %s199 = scalar_lea.sflag [#allocation6], %s198
          %s200 = sand.u32 %s55, 1
          %s201 = smul.addr %s200, 32
          %s202 = scalar_lea.vmem [#allocation5], %s201
          %s203 = smul.u32 4, %s19
          %s205 = ssub.s32 512, 512
          %206 = vsyncadd %s199, %s205
          %s207 = smul.addr %s203, 128
          %s208 = scalar_lea.hbm %s1, %s207
          %s209 = sshll.u32 %s202, 4
          %s210 = int_to_ptr.vmem [resolvable:$true] %s209
          %215 = dma.hbm_to_vmem [thread:$0]  %s208, 512, %s210, %s199, 128, 128, 8
        $region32: #{tpu_custom_call.1} parent=23 // pred_fallthru
          _
      $region24: #{tpu_custom_call.1} parent=5 // pred_fallthru
        _
      %p216 = scmp.le.s32.totalorder 1, %s19
      %p217 = scmp.lt.s32.totalorder %s19, 3
      %p218 = pnand %p216, %p217
      %p219 = pneg %p218
      // Predicated region
      $region33: #{tpu_custom_call.1} parent=5 // pred_check
        _
      $region34: #{tpu_custom_call.1} parent=5 // pred_check_branch
        %221 = sbr.rel (%p218) target = $region36
      $region35: #{tpu_custom_call.1} parent=5 // pred_region
        %s222 = ssub.s32 %s19, 1
        %s223 = sand.u32 %s32, 1
        %s224 = scalar_lea.sflag [#allocation3], %s223
        %s225 = sand.u32 %s32, 1
        %s226 = smul.addr %s225, 32
        %s227 = scalar_lea.vmem [#allocation2], %s226
        // Predicated region
        $region37: #{tpu_custom_call.1} parent=35 // pred_check
          %p228 = pneg %p45
        $region38: #{tpu_custom_call.1} parent=35 // pred_check_branch
          %230 = sbr.rel (%p228) target = $region40
        $region39: #{tpu_custom_call.1} parent=35 // pred_region
          %231 = dma.done %s224, 512
        $region40: #{tpu_custom_call.1} parent=35 // pred_fallthru
          _
        %s232 = sand.u32 %s24, 1
        %s233 = scalar_lea.sflag [#allocation6], %s232
        %s234 = sand.u32 %s58, 1
        %s235 = smul.addr %s234, 32
        %s236 = scalar_lea.vmem [#allocation5], %s235
        // Predicated region
        $region41: #{tpu_custom_call.1} parent=35 // pred_check
          %p237 = pneg %p71
        $region42: #{tpu_custom_call.1} parent=35 // pred_check_branch
          %239 = sbr.rel (%p237) target = $region44
        $region43: #{tpu_custom_call.1} parent=35 // pred_region
          %240 = dma.done %s233, 512
        $region44: #{tpu_custom_call.1} parent=35 // pred_fallthru
          _
        // Predicated region
        $region45: #{tpu_custom_call.1} parent=35 // pred_check
          %p241 = pneg %p92
        $region46: #{tpu_custom_call.1} parent=35 // pred_check_branch
          %243 = sbr.rel (%p241) target = $region48
        $region47: #{tpu_custom_call.1} parent=35 // pred_region
          %244 = dma.done [#allocation6], 4096
        $region48: #{tpu_custom_call.1} parent=35 // pred_fallthru
          _
        %s245 = sand.u32 %s32, 1
        %s246 = scalar_lea.sflag [#allocation3], %s245
        %s247 = sand.u32 %s32, 1
        %s248 = smul.addr %s247, 32
        %s249 = scalar_lea.vmem [#allocation2], %s248
        %p250 = pneg %p45
        %p251 = pneg %p42
        %s252 = sand.u32 %s24, 1
        %s253 = scalar_lea.sflag [#allocation6], %s252
        %s254 = sand.u32 %s58, 1
        %s255 = smul.addr %s254, 32
        %s256 = scalar_lea.vmem [#allocation5], %s255
        %p257 = pneg %p71
        %p258 = pneg %p68
        %p259 = pneg %p92
        %p260 = pneg %p89
        %p261 = pneg %p113
        %p262 = pneg %p110
        %p263 = pneg %p139
        %p264 = pneg %p136
        %s265 = sand.u32 %s126, 1
        %s266 = scalar_lea.sflag [#allocation4], %s265
        %s267 = sand.u32 %s126, 1
        %s268 = smul.addr %s267, 32
        %s269 = scalar_lea.vmem [#allocation8], %s268
        %s270 = smul.u32 4, %s24
        %s271 = smul.u32 4, %s24
        %s272 = smul.u32 4, %s24
        %v273 = vld [vmem:[%s227] sm:$0xff]
        %v274 = vld [vmem:[%s227 + $0x8] sm:$0xff]
        %v275 = vld [vmem:[%s227 + $0x10] sm:$0xff]
        %v276 = vld [vmem:[%s227 + $0x18] sm:$0xff]
        %v277 = vld [vmem:[%s236] sm:$0xff]
        %v278 = vld [vmem:[%s236 + $0x8] sm:$0xff]
        %v279 = vld [vmem:[%s236 + $0x10] sm:$0xff]
        %v280 = vld [vmem:[%s236 + $0x18] sm:$0xff]
        %v281 = vld [vmem:[#allocation7] sm:$0xff]
        %v282 = vld [vmem:[#allocation7 + $0x8] sm:$0xff]
        %v283 = vld [vmem:[#allocation7 + $0x10] sm:$0xff]
        %v284 = vld [vmem:[#allocation7 + $0x18] sm:$0xff]
        %v285 = vld [vmem:[#allocation7 + $0x20] sm:$0xff]
        %v286 = vld [vmem:[#allocation7 + $0x28] sm:$0xff]
        %v287 = vld [vmem:[#allocation7 + $0x30] sm:$0xff]
        %v288 = vld [vmem:[#allocation7 + $0x38] sm:$0xff]
        %v289 = vld [vmem:[#allocation7 + $0x40] sm:$0xff]
        %v290 = vld [vmem:[#allocation7 + $0x48] sm:$0xff]
        %v291 = vld [vmem:[#allocation7 + $0x50] sm:$0xff]
        %v292 = vld [vmem:[#allocation7 + $0x58] sm:$0xff]
        %v293 = vld [vmem:[#allocation7 + $0x60] sm:$0xff]
        %v294 = vld [vmem:[#allocation7 + $0x68] sm:$0xff]
        %v295 = vld [vmem:[#allocation7 + $0x70] sm:$0xff]
        %v296 = vld [vmem:[#allocation7 + $0x78] sm:$0xff]
        %v297 = vld [vmem:[#allocation7 + $0x80] sm:$0xff]
        %v298 = vld [vmem:[#allocation7 + $0x88] sm:$0xff]
        %v299 = vld [vmem:[#allocation7 + $0x90] sm:$0xff]
        %v300 = vld [vmem:[#allocation7 + $0x98] sm:$0xff]
        %v301 = vld [vmem:[#allocation7 + $0xa0] sm:$0xff]
        %v302 = vld [vmem:[#allocation7 + $0xa8] sm:$0xff]
        %v303 = vld [vmem:[#allocation7 + $0xb0] sm:$0xff]
        %v304 = vld [vmem:[#allocation7 + $0xb8] sm:$0xff]
        %v305 = vld [vmem:[#allocation7 + $0xc0] sm:$0xff]
        %v306 = vld [vmem:[#allocation7 + $0xc8] sm:$0xff]
        %v307 = vld [vmem:[#allocation7 + $0xd0] sm:$0xff]
        %v308 = vld [vmem:[#allocation7 + $0xd8] sm:$0xff]
        %v309 = vld [vmem:[#allocation7 + $0xe0] sm:$0xff]
        %v310 = vld [vmem:[#allocation7 + $0xe8] sm:$0xff]
        %v311 = vld [vmem:[#allocation7 + $0xf0] sm:$0xff]
        %v312 = vld [vmem:[#allocation7 + $0xf8] sm:$0xff]
        %v313 = vld [vmem:[%s3] sm:$0x1]
        %v315 = vlaneseq
        %v316 = vshrl.u32 %v315, 7
        %v317 = vsub.s32 0, %v316
        %v318 = vrot.slane %v313, %v317
        %320 = vmatprep.subr.mxu0 0.0
        %321 = vmatpush1.msra.mxu0 %v281
        %322 = vmatprep.subr.mxu0 0.0
        %323 = vmatpush1.msra.mxu0 %v282
        %324 = vmatprep.subr.mxu0 0.0
        %325 = vmatpush1.msra.mxu0 %v283
        %326 = vmatprep.subr.mxu0 0.0
        %327 = vmatpush1.msra.mxu0 %v284
        %328 = vmatprep.subr.mxu0 0.0
        %329 = vmatpush1.msra.mxu0 %v285
        %330 = vmatprep.subr.mxu0 0.0
        %331 = vmatpush1.msra.mxu0 %v286
        %332 = vmatprep.subr.mxu0 0.0
        %333 = vmatpush1.msra.mxu0 %v287
        %334 = vmatprep.subr.mxu0 0.0
        %335 = vmatpush1.msra.mxu0 %v288
        %336 = vmatprep.subr.mxu0 0.0
        %337 = vmatpush1.msra.mxu0 %v289
        %338 = vmatprep.subr.mxu0 0.0
        %339 = vmatpush1.msra.mxu0 %v290
        %340 = vmatprep.subr.mxu0 0.0
        %341 = vmatpush1.msra.mxu0 %v291
        %342 = vmatprep.subr.mxu0 0.0
        %343 = vmatpush1.msra.mxu0 %v292
        %344 = vmatprep.subr.mxu0 0.0
        %345 = vmatpush1.msra.mxu0 %v293
        %346 = vmatprep.subr.mxu0 0.0
        %347 = vmatpush1.msra.mxu0 %v294
        %348 = vmatprep.subr.mxu0 0.0
        %349 = vmatpush1.msra.mxu0 %v295
        %350 = vmatprep.subr.mxu0 0.0
        %351 = vmatpush1.msra.mxu0 %v296
        %352 = vmatprep.subr.mxu0 0.0
        %353 = vmatpush1.msra.mxu0 %v297
        %354 = vmatprep.subr.mxu0 0.0
        %355 = vmatpush1.msra.mxu0 %v298
        %356 = vmatprep.subr.mxu0 0.0
        %357 = vmatpush1.msra.mxu0 %v299
        %358 = vmatprep.subr.mxu0 0.0
        %359 = vmatpush1.msra.mxu0 %v300
        %360 = vmatprep.subr.mxu0 0.0
        %361 = vmatpush1.msra.mxu0 %v301
        %362 = vmatprep.subr.mxu0 0.0
        %363 = vmatpush1.msra.mxu0 %v302
        %364 = vmatprep.subr.mxu0 0.0
        %365 = vmatpush1.msra.mxu0 %v303
        %366 = vmatprep.subr.mxu0 0.0
        %367 = vmatpush1.msra.mxu0 %v304
        %368 = vmatprep.subr.mxu0 0.0
        %369 = vmatpush1.msra.mxu0 %v305
        %370 = vmatprep.subr.mxu0 0.0
        %371 = vmatpush1.msra.mxu0 %v306
        %372 = vmatprep.subr.mxu0 0.0
        %373 = vmatpush1.msra.mxu0 %v307
        %374 = vmatprep.subr.mxu0 0.0
        %375 = vmatpush1.msra.mxu0 %v308
        %376 = vmatprep.subr.mxu0 0.0
        %377 = vmatpush1.msra.mxu0 %v309
        %378 = vmatprep.subr.mxu0 0.0
        %379 = vmatpush1.msra.mxu0 %v310
        %380 = vmatprep.subr.mxu0 0.0
        %381 = vmatpush1.msra.mxu0 %v311
        %382 = vmatprep.subr.mxu0 0.0
        %383 = vmatpush1.msra.mxu0 %v312
        %384 = vmatprep.mubr.f32.mxu0 %v277
        %385 = vmatmul.mubr.f32.gmra.mrb[0].mxu0 %v273
        %v386 = vpop.f32.mrb[0].mxu0
        %v387 = vadd.f32 %v318, %v386
        %v388 = vpop.f32.mrb[0].mxu0
        %389 = vmatprep.mubr.f32.mxu0 %v278
        %390 = vmatmul.mubr.f32.gmra.mrb[0].mxu0 %v274
        %v391 = vpop.f32.mrb[0].mxu0
        %v392 = vadd.f32 %v318, %v391
        %v393 = vpop.f32.mrb[0].mxu0
        %394 = vmatprep.mubr.f32.mxu0 %v279
        %395 = vmatmul.mubr.f32.gmra.mrb[0].mxu0 %v275
        %v396 = vpop.f32.mrb[0].mxu0
        %v397 = vadd.f32 %v318, %v396
        %v398 = vpop.f32.mrb[0].mxu0
        %399 = vmatprep.mubr.f32.mxu0 %v280
        %400 = vmatmul.mubr.f32.gmra.mrb[0].mxu0 %v276
        %v401 = vpop.f32.mrb[0].mxu0
        %v402 = vadd.f32 %v318, %v401
        %v403 = vpop.f32.mrb[0].mxu0
        %404 = vdwg.mxu0
        %v405 = vxor.u32 %v387, 2147483648
        %v406 = vxor.u32 %v392, 2147483648
        %v407 = vxor.u32 %v397, 2147483648
        %v408 = vxor.u32 %v402, 2147483648
        %v409 = vmul.f32 %v405, 1.442695
        %v410 = vpow.pop %v409
        %v411 = vmul.f32 %v406, 1.442695
        %v412 = vpow.pop %v411
        %v413 = vmul.f32 %v407, 1.442695
        %v414 = vpow.pop %v413
        %v415 = vmul.f32 %v408, 1.442695
        %v416 = vpow.pop %v415
        %v417 = vadd.f32 %v410, 1.0
        %v418 = vadd.f32 %v412, 1.0
        %v419 = vadd.f32 %v414, 1.0
        %v420 = vadd.f32 %v416, 1.0
        %v421 = vrcp.pop %v417
        %v422 = vmul.f32 1.0, %v421
        %v423 = vrcp.pop %v418
        %v424 = vmul.f32 1.0, %v423
        %v425 = vrcp.pop %v419
        %v426 = vmul.f32 1.0, %v425
        %v427 = vrcp.pop %v420
        %v428 = vmul.f32 1.0, %v427
        %v429 = vadd.f32 %v422, 1.0
        %v430 = vadd.f32 %v424, 1.0
        %v431 = vadd.f32 %v426, 1.0
        %v432 = vadd.f32 %v428, 1.0
        %v433 = vmul.f32 %v429, %v273
        %v434 = vmul.f32 %v430, %v274
        %v435 = vmul.f32 %v431, %v275
        %v436 = vmul.f32 %v432, %v276
        %v437 = vsub.f32 2.0, %v422
        %v438 = vsub.f32 2.0, %v424
        %v439 = vsub.f32 2.0, %v426
        %v440 = vsub.f32 2.0, %v428
        %v441 = vmul.f32 %v437, %v277
        %v442 = vmul.f32 %v438, %v278
        %v443 = vmul.f32 %v439, %v279
        %v444 = vmul.f32 %v440, %v280
        %v445 = vadd.f32 %v433, %v441
        %v446 = vadd.f32 %v434, %v442
        %v447 = vadd.f32 %v435, %v443
        %v448 = vadd.f32 %v436, %v444
        %449 = vst [vmem:[%s269] sm:$0xff] %v445
        %450 = vst [vmem:[%s269 + $0x8] sm:$0xff] %v446
        %451 = vst [vmem:[%s269 + $0x10] sm:$0xff] %v447
        %452 = vst [vmem:[%s269 + $0x18] sm:$0xff] %v448
        %s453 = sand.u32 %s126, 1
        %s454 = scalar_lea.sflag [#allocation4], %s453
        %s455 = sand.u32 %s126, 1
        %s456 = smul.addr %s455, 32
        %s457 = scalar_lea.vmem [#allocation8], %s456
        // Predicated region
        $region49: #{tpu_custom_call.1} parent=35 // pred_check
          %p458 = pneg %p136
        $region50: #{tpu_custom_call.1} parent=35 // pred_check_branch
          %460 = sbr.rel (%p458) target = $region52
        $region51: #{tpu_custom_call.1} parent=35 // pred_region
          %s461 = smul.u32 4, %s24
          %s463 = ssub.s32 512, 512
          %464 = vsyncadd %s454, %s463
          %s465 = smul.addr %s461, 128
          %s466 = scalar_lea.hbm %s4, %s465
          %s467 = sshll.u32 %s457, 4
          %s468 = int_to_ptr.vmem [resolvable:$true] %s467
          %473 = dma.vmem_to_hbm [thread:$0]  %s468, 512, %s466, %s454, 128, 128, 8
        $region52: #{tpu_custom_call.1} parent=35 // pred_fallthru
          _
      $region36: #{tpu_custom_call.1} parent=5 // pred_fallthru
        _
      %p474 = scmp.le.s32.totalorder 2, %s19
      // Predicated region
      $region53: #{tpu_custom_call.1} parent=5 // pred_check
        %p475 = pneg %p474
      $region54: #{tpu_custom_call.1} parent=5 // pred_check_branch
        %477 = sbr.rel (%p475) target = $region56
      $region55: #{tpu_custom_call.1} parent=5 // pred_region
        %s478 = ssub.s32 %s19, 2
        // Predicated region
        $region57: #{tpu_custom_call.1} parent=55 // pred_check
          %p479 = pneg %p142
        $region58: #{tpu_custom_call.1} parent=55 // pred_check_branch
          %481 = sbr.rel (%p479) target = $region60
        $region59: #{tpu_custom_call.1} parent=55 // pred_region
          %s482 = sand.u32 %s127, 1
          %s483 = scalar_lea.sflag [#allocation4], %s482
          %s484 = sand.u32 %s127, 1
          %s485 = smul.addr %s484, 32
          %s486 = scalar_lea.vmem [#allocation8], %s485
          %487 = dma.done %s483, 512
        $region60: #{tpu_custom_call.1} parent=55 // pred_fallthru
          _
      $region56: #{tpu_custom_call.1} parent=5 // pred_fallthru
        _
    $region6: #{tpu_custom_call.1} parent=1 // loop_footer
      %s23 = sadd.s32 1, %s19
    $region7: #{tpu_custom_call.1} parent=1 // loop_footer_branch
      %18 = sbr.rel target = $region3
    $region8: #{tpu_custom_call.1} parent=1 // loop_exit
      _
    %488 = vsyncpa [#allocation3], 1
    %s489 = scalar_lea.sflag [#allocation3], 1
    %490 = vsyncpa %s489, 1
    %491 = vsyncpa [#allocation6], 1
    %s492 = scalar_lea.sflag [#allocation6], 1
    %493 = vsyncpa %s492, 1
    %494 = vsyncpa [#allocation4], 1
    %s495 = scalar_lea.sflag [#allocation4], 1
    %496 = vsyncpa %s495, 1

</llo_original>
